<compile_context>
chip_gen: v5e
topology: v5e:2x2
jax: 0.10.0
libtpu: 0.0.40
codegen_flags: <defaults>
</compile_context>

<pallas_src>
import functools
import math

import jax
import jax.numpy as jnp
from jax.experimental import pallas as pl
from jax.experimental.pallas import tpu as pltpu


# ----------------------------- kernel ----------------------------------------


def _linear_bias_kernel(x_ref, w_ref, b_ref, o_ref):
    # x_ref: (tm, K)  input tile, compute dtype (e.g. bf16) -- streamed
    # w_ref: (K, N)   packed weights, compute dtype (grid-invariant block)
    # b_ref: (1, N)   packed bias, f32 (grid-invariant block)
    # o_ref: (tm, N)  output tile
    x = x_ref[...]
    if x.dtype != w_ref.dtype:
        # Only traced in the rare case weight is narrower than x (matches
        # PyTorch's x.type(weight.dtype)); common paths have matching dtypes.
        x = x.astype(w_ref.dtype)
    acc = jnp.dot(x, w_ref[...], preferred_element_type=jnp.float32)
    o_ref[...] = (acc + b_ref[...]).astype(o_ref.dtype)


def _tiled_linear(x2d, w_t, b_row, out_dtype, *, tm, vmem_limit_bytes):
    """out[M, N] = x2d[M, K] @ w_t[K, N] + b_row[1, N], accumulated in f32."""
    M, K = x2d.shape
    _, N = w_t.shape
    out_dtype = jnp.dtype(out_dtype)

    grid = (pl.cdiv(M, tm),)  # partial tail block handled by Pallas

    bytes_accessed = int(
        M * K * x2d.dtype.itemsize          # streamed input
        + K * N * w_t.dtype.itemsize        # weights (once)
        + N * b_row.dtype.itemsize          # bias (once)
        + M * N * out_dtype.itemsize        # streamed output
    )
    flops = 2 * M * K * N

    return pl.pallas_call(
        _linear_bias_kernel,
        out_shape=jax.ShapeDtypeStruct((M, N), out_dtype),
        grid_spec=pltpu.PrefetchScalarGridSpec(
            num_scalar_prefetch=0,
            grid=grid,
            in_specs=[
                pl.BlockSpec((tm, K), lambda i: (i, 0)),
                pl.BlockSpec((K, N), lambda i: (0, 0)),       # grid-invariant
                pl.BlockSpec((1, N), lambda i: (0, 0)),       # grid-invariant
            ],
            out_specs=pl.BlockSpec((tm, N), lambda i: (i, 0)),
        ),
        compiler_params=pltpu.CompilerParams(
            dimension_semantics=("parallel",),
            vmem_limit_bytes=vmem_limit_bytes,
        ),
        cost_estimate=pl.CostEstimate(
            flops=flops, transcendentals=0, bytes_accessed=bytes_accessed
        ),
    )(x2d, w_t, b_row)


# ------------------------ chip-aware configuration ---------------------------


def _chip_config():
    """(vmem_limit_bytes, lane_target, multi_core) for the current backend."""
    kind = ""
    try:
        kind = jax.devices()[0].device_kind.lower()
    except Exception:
        pass

    vmem_phys = None
    try:
        info = pltpu.get_tpu_info()
        vmem_phys = int(getattr(info, "vmem_capacity_bytes", 0)) or None
    except Exception:
        vmem_phys = None
    if vmem_phys is None:
        if ("v4" in kind) or ("v5" in kind) or ("v6" in kind):
            vmem_phys = 128 * 1024 * 1024
        else:
            vmem_phys = 64 * 1024 * 1024    # conservative (covers v7x / unknown)

    multi_core = "v7" in kind               # 2 TensorCores per chip on v7x
    lane_target = 256 if (("v6" in kind) or ("v7" in kind)) else 128

    vmem_limit = min(96 * 1024 * 1024, int(vmem_phys * 0.70))
    if multi_core:
        vmem_limit = min(vmem_limit, 48 * 1024 * 1024)   # v7x: only 64 MiB/TC
    return vmem_limit, lane_target, multi_core


def _choose_pack(d_out, lane_target):
    if d_out >= lane_target:
        return 1
    return max(1, min(8, lane_target // d_out))


def _compute_dtype(x_dtype, w_dtype):
    x_dtype, w_dtype = jnp.dtype(x_dtype), jnp.dtype(w_dtype)
    if not jnp.issubdtype(x_dtype, jnp.floating):
        return w_dtype
    # MXU at DEFAULT precision truncates f32 operands to bf16 anyway, so
    # compute in the narrower dtype and skip redundant casts / wide streams.
    return x_dtype if x_dtype.itemsize <= w_dtype.itemsize else w_dtype


def _choose_tm(m_rows, k_packed, n_packed, compute_itemsize, out_itemsize,
               vmem_limit_bytes, multi_core, tm_override=None):
    if m_rows <= 8:
        return max(1, m_rows)
    if tm_override is not None:
        tm = min(int(tm_override), m_rows)
        if tm < m_rows:
            tm = max(8, (tm // 8) * 8)
        return tm

    pad = lambda v: -(-v // 128) * 128      # lane padding of VMEM tiles
    # Double-buffered input + output tiles; weights/bias/scratch live in the
    # remaining ~45% headroom of the scoped VMEM limit.
    bytes_per_row = 2 * pad(k_packed) * compute_itemsize + 2 * pad(n_packed) * out_itemsize
    budget = int(vmem_limit_bytes * 0.55)
    tm = budget // max(1, bytes_per_row)
    tm = min(tm, 16384, m_rows)
    if multi_core:
        # Give each of the 2 TensorCores >= 2 grid steps to shard over.
        tm = min(tm, -(-m_rows // 4))
    return max(8, (tm // 8) * 8)


# ----------------------------- param packing ---------------------------------


def _block_diag(wt, pack):
    d_in, d_out = wt.shape
    if pack == 1:
        return wt
    zero = jnp.zeros((d_in, d_out), wt.dtype)
    rows = []
    for i in range(pack):
        rows.append(jnp.concatenate(
            [wt if j == i else zero for j in range(pack)], axis=1))
    return jnp.concatenate(rows, axis=0)     # (pack*d_in, pack*d_out)


def prepare_template_pair_embedder(weight, bias, *, x_dtype, out_dtype=None,
                                    pack=None):
    """Pack nn.Linear params once (hoisted out of the per-forward path).

    weight: (d_out, d_in) PyTorch-convention Linear weight
    bias:   (d_out,)
    Returns (w_packed, b_packed, cfg) to be passed to
    `template_pair_embedder_apply`.
    """
    weight = jnp.asarray(weight)
    bias = jnp.asarray(bias)
    d_out, d_in = weight.shape

    vmem_limit, lane_target, multi_core = _chip_config()
    compute_dtype = _compute_dtype(x_dtype, weight.dtype)
    if out_dtype is None:
        out_dtype = weight.dtype             # module contract: out in W.dtype
    if pack is None:
        pack = _choose_pack(d_out, lane_target)

    wt = weight.T.astype(compute_dtype)                      # (d_in, d_out)
    w_packed = _block_diag(wt, pack)                         # (p*d_in, p*d_out)
    b_packed = jnp.tile(bias.astype(jnp.float32), pack).reshape(1, pack * d_out)

    cfg = dict(
        d_in=int(d_in),
        d_out=int(d_out),
        pack=int(pack),
        vmem_limit_bytes=int(vmem_limit),
        multi_core=bool(multi_core),
        out_dtype_name=jnp.dtype(out_dtype).name,
    )
    return w_packed, b_packed, cfg


# ----------------------------- forward ---------------------------------------


@functools.partial(
    jax.jit,
    static_argnames=("d_in", "d_out", "pack", "tm", "vmem_limit_bytes",
                     "out_dtype_name"),
)
def _forward(x, w_packed, b_packed, *, d_in, d_out, pack, tm,
             vmem_limit_bytes, out_dtype_name):
    lead = x.shape[:-1]
    M = int(math.prod(lead)) if lead else 1
    x2d = x.reshape(-1, d_in)

    m_pad = -(-M // pack) * pack
    if m_pad != M:
        # One-or-few free zero rows keep the lane-dense packed output path.
        x2d = jnp.pad(x2d, ((0, m_pad - M), (0, 0)))
    x_in = x2d.reshape(m_pad // pack, pack * d_in)           # contiguous reshape

    out = _tiled_linear(x_in, w_packed, b_packed, jnp.dtype(out_dtype_name),
                        tm=tm, vmem_limit_bytes=vmem_limit_bytes)
    out = out.reshape(m_pad, d_out)
    if m_pad != M:
        out = out[:M]
    return out.reshape(*lead, d_out)


def template_pair_embedder_apply(x, w_packed, b_packed, cfg, *, tm=None):
    """Forward with pre-packed params (preferred: pack params once, reuse)."""
    d_in, d_out, pack = cfg["d_in"], cfg["d_out"], cfg["pack"]
    lead = x.shape[:-1]
    M = int(math.prod(lead)) if lead else 1
    m_rows = -(-M // pack)                                   # packed kernel rows
    tm_eff = _choose_tm(
        m_rows,
        pack * d_in,
        pack * d_out,
        jnp.dtype(w_packed.dtype).itemsize,
        jnp.dtype(cfg["out_dtype_name"]).itemsize,
        cfg["vmem_limit_bytes"],
        cfg["multi_core"],
        tm_override=tm,
    )
    return _forward(
        x, w_packed, b_packed,
        d_in=d_in, d_out=d_out, pack=pack, tm=tm_eff,
        vmem_limit_bytes=cfg["vmem_limit_bytes"],
        out_dtype_name=cfg["out_dtype_name"],
    )


def template_pair_embedder(x, weight, bias, *, out_dtype=None, tm=None, pack=None):
    """One-shot convenience wrapper: TemplatePairEmbedder.forward, v2_feature=False.

    x:      [..., d_in] template pair features (any leading dims / float dtype)
    weight: (d_out, d_in) nn.Linear weight, bias: (d_out,)
    returns [..., d_out] in weight.dtype (unless out_dtype is given)
    """
    # TODO(synk): v2_feature=True path (list of per-feature Linears plus
    # LayerNorm(z) -> Linear residual) is not implemented; this covers the
    # default v2_feature=False forward (single Linear with dtype cast).
    w_packed, b_packed, cfg = prepare_template_pair_embedder(
        weight, bias, x_dtype=x.dtype, out_dtype=out_dtype, pack=pack)
    return template_pair_embedder_apply(x, w_packed, b_packed, cfg, tm=tm)


# ----------------------------- demo / self-test ------------------------------

if __name__ == "__main__":
    # Unifold TemplatePairEmbedder (v2_feature=False): d_in=88 template pair
    # features -> d_out=64 (c_t).  Small demo shapes.
    d_in, d_out = 88, 64
    batch, n_templ, n_res = 2, 2, 16        # M = 2*2*16*16 = 1024 rows

    key = jax.random.PRNGKey(0)
    kx, kw, kb, kx2 = jax.random.split(key, 4)

    # nn.Linear parameters: W (d_out, d_in), b (d_out,)
    weight = jax.random.normal(kw, (d_out, d_in), dtype=jnp.float32) * 0.1
    bias = jax.random.normal(kb, (d_out,), dtype=jnp.float32) * 0.1

    # Input in bf16: the matmul runs in bf16 with f32 accumulation, no
    # wrapper-side or in-kernel f32 materialization of x.
    x = jax.random.normal(
        kx, (batch, n_templ, n_res, n_res, d_in), dtype=jnp.bfloat16
    )

    # Pack params once (hoisted out of the per-forward path), then apply.
    w_packed, b_packed, cfg = prepare_template_pair_embedder(
        weight, bias, x_dtype=x.dtype)
    y = template_pair_embedder_apply(x, w_packed, b_packed, cfg)
    y = jax.block_until_ready(y)

    # Pure-JAX reference (same semantics as the PyTorch forward).
    y_ref = x.astype(weight.dtype) @ weight.T + bias

    assert y.shape == (batch, n_templ, n_res, n_res, d_out)
    assert y.dtype == weight.dtype
    # Tolerance absorbs the bf16 MXU pass (same regime as the XLA reference at
    # default precision); any logic error (wrong packing, missing bias, wrong
    # transpose) would be orders of magnitude larger.
    assert jnp.allclose(y, y_ref, atol=2e-2, rtol=2e-2), float(
        jnp.max(jnp.abs(y - y_ref))
    )

    # Row count not divisible by the pack factor exercises the zero-row
    # padding path (kept lane-dense instead of falling back to masked stores).
    x_odd = jax.random.normal(kx2, (3, 5, d_in), dtype=jnp.bfloat16)
    y_odd = jax.block_until_ready(template_pair_embedder(x_odd, weight, bias))
    y_odd_ref = x_odd.astype(weight.dtype) @ weight.T + bias
    assert y_odd.shape == (3, 5, d_out)
    assert jnp.allclose(y_odd, y_odd_ref, atol=2e-2, rtol=2e-2), float(
        jnp.max(jnp.abs(y_odd - y_odd_ref))
    )

    print("KERNEL_OK")
</pallas_src>

<mosaic_0001>
module attributes {stable_mosaic.version = 11 : i64} {
  func.func @_linear_bias_kernel(%arg0: i32, %arg1: memref<512x176xbf16, #tpu.memory_space<vmem>>, %arg2: memref<176x128xbf16, #tpu.memory_space<vmem>>, %arg3: memref<1x128xf32, #tpu.memory_space<vmem>>, %arg4: memref<512x128xf32, #tpu.memory_space<vmem>>) attributes {dimension_semantics = [#tpu.dimension_semantics<parallel>], iteration_bounds = array<i64: 1>, scalar_prefetch = 0 : i64, scratch_operands = 0 : i64, tpu.core_type = #tpu.core_type<tc>, window_params = [{transform_indices = @transform_0, window_bounds = array<i64: 512, 176>}, {pipeline_mode = #tpu.pipeline_mode<synchronous>, transform_indices = @transform_1, window_bounds = array<i64: 176, 128>}, {pipeline_mode = #tpu.pipeline_mode<synchronous>, transform_indices = @transform_2, window_bounds = array<i64: 1, 128>}, {transform_indices = @transform_3, window_bounds = array<i64: 512, 128>}]} {
    %c0 = arith.constant 0 : index
    %c0_0 = arith.constant 0 : index
    %0 = vector.load %arg1[%c0, %c0_0] : memref<512x176xbf16, #tpu.memory_space<vmem>>, vector<512x176xbf16>
    %c0_1 = arith.constant 0 : index
    %c0_2 = arith.constant 0 : index
    %1 = vector.load %arg2[%c0_1, %c0_2] : memref<176x128xbf16, #tpu.memory_space<vmem>>, vector<176x128xbf16>
    %cst = arith.constant dense<0.000000e+00> : vector<512x128xf32>
    %2 = tpu.matmul %0, %1, %cst {dimension_numbers = #tpu.dot_dimension_numbers<[1], [0], [0], [1], [0, 0, 1, 1], [], []>} : vector<512x176xbf16>, vector<176x128xbf16>, vector<512x128xf32> -> vector<512x128xf32>
    %c0_3 = arith.constant 0 : index
    %c0_4 = arith.constant 0 : index
    %3 = vector.load %arg3[%c0_3, %c0_4] : memref<1x128xf32, #tpu.memory_space<vmem>>, vector<1x128xf32>
    %4 = vector.broadcast %3 : vector<1x128xf32> to vector<512x128xf32>
    %5 = arith.addf %2, %4 : vector<512x128xf32>
    %c0_5 = arith.constant 0 : index
    %c0_6 = arith.constant 0 : index
    %6 = vector.load %arg4[%c0_5, %c0_6] : memref<512x128xf32, #tpu.memory_space<vmem>>, vector<512x128xf32>
    tpu.vector_store %arg4[%c0_5, %c0_6], %5 {strides = array<i32>} : memref<512x128xf32, #tpu.memory_space<vmem>>, vector<512x128xf32>,
    return
  }
  func.func @transform_0(%arg0: i32) -> (i32, i32) {
    %c0_i32 = arith.constant 0 : i32
    %c0_i32_0 = arith.constant 0 : i32
    return %arg0, %c0_i32 : i32, i32
  }
  func.func @transform_1(%arg0: i32) -> (i32, i32) {
    %c0_i32 = arith.constant 0 : i32
    %c0_i32_0 = arith.constant 0 : i32
    %c0_i32_1 = arith.constant 0 : i32
    return %c0_i32, %c0_i32_0 : i32, i32
  }
  func.func @transform_2(%arg0: i32) -> (i32, i32) {
    %c0_i32 = arith.constant 0 : i32
    %c0_i32_0 = arith.constant 0 : i32
    %c0_i32_1 = arith.constant 0 : i32
    return %c0_i32, %c0_i32_0 : i32, i32
  }
  func.func @transform_3(%arg0: i32) -> (i32, i32) {
    %c0_i32 = arith.constant 0 : i32
    %c0_i32_0 = arith.constant 0 : i32
    return %arg0, %c0_i32 : i32, i32
  }
}

</mosaic_0001>

<llo_original>
// kernel: _forward.1
$region0: #{_forward.1}
  #allocation0 [shape = 'u32[]', space=smem, size = 0x4, offset = 0x4, fixed_abs, tag = 'smem constant byte address 0x4 - core index']
  #allocation1 [shape = 'u32[72,128]{1,0:T(1,128)}', space=vmem, size = 0x9000, scoped, tag = 'internal scratch']
  %s0 = inlined_call_operand.vmem [shape: bf16[512,176], index: 0, kind: input, shape index: {}]
  %s1 = inlined_call_operand.vmem [shape: bf16[176,128], index: 1, kind: input, shape index: {}]
  %s2 = inlined_call_operand.vmem [shape: f32[1,128], index: 2, kind: input, shape index: {}]
  %s3 = inlined_call_operand.vmem [shape: f32[512,128], index: 3, kind: output, shape index: {}]
  %s4 = sld [smem:[#allocation0]]
  $region22: #{_forward.1} parent=0
    _
  %s6 = ssub.s32 1, %s4
  %s7 = scalar_select 0, %s6, %s4
  // Predicated region
  $region2: #{_forward.1} parent=0 // pred_check
    _
  $region3: #{_forward.1} parent=0 // pred_check_branch
    %9 = sbr.rel (0) target = $region5
  $region4: #{_forward.1} parent=0 // pred_region
    _
  $region5: #{_forward.1} parent=0 // pred_fallthru
    _
  // Predicated region
  $region6: #{_forward.1} parent=0 // pred_check
    _
  $region7: #{_forward.1} parent=0 // pred_check_branch
    %11 = sbr.rel (0) target = $region9
  $region8: #{_forward.1} parent=0 // pred_region
    _
  $region9: #{_forward.1} parent=0 // pred_fallthru
    _
  // Predicated region
  $region10: #{_forward.1} parent=0 // pred_check
    _
  $region11: #{_forward.1} parent=0 // pred_check_branch
    %13 = sbr.rel (0) target = $region13
  $region12: #{_forward.1} parent=0 // pred_region
    _
  $region13: #{_forward.1} parent=0 // pred_fallthru
    _
  %v15 = vld [vmem:[%s0] sm:$0xff]
  %v16 = vld [vmem:[%s0 + $0x8] sm:$0xff]
  %v17 = vld [vmem:[%s0 + $0x10] sm:$0xff]
  %v18 = vld [vmem:[%s0 + $0x18] sm:$0xff]
  %v19 = vld [vmem:[%s0 + $0x20] sm:$0xff]
  %v20 = vld [vmem:[%s0 + $0x28] sm:$0xff]
  %v21 = vld [vmem:[%s0 + $0x30] sm:$0xff]
  %v22 = vld [vmem:[%s0 + $0x38] sm:$0xff]
  %v23 = vld [vmem:[%s0 + $0x40] sm:$0xff]
  %v24 = vld [vmem:[%s0 + $0x48] sm:$0xff]
  %v25 = vld [vmem:[%s0 + $0x50] sm:$0xff]
  %v26 = vld [vmem:[%s0 + $0x58] sm:$0xff]
  %v27 = vld [vmem:[%s0 + $0x60] sm:$0xff]
  %v28 = vld [vmem:[%s0 + $0x68] sm:$0xff]
  %v29 = vld [vmem:[%s0 + $0x70] sm:$0xff]
  %v30 = vld [vmem:[%s0 + $0x78] sm:$0xff]
  %v31 = vld [vmem:[%s0 + $0x80] sm:$0xff]
  %v32 = vld [vmem:[%s0 + $0x88] sm:$0xff]
  %v33 = vld [vmem:[%s0 + $0x90] sm:$0xff]
  %v34 = vld [vmem:[%s0 + $0x98] sm:$0xff]
  %v35 = vld [vmem:[%s0 + $0xa0] sm:$0xff]
  %v36 = vld [vmem:[%s0 + $0xa8] sm:$0xff]
  %v37 = vld [vmem:[%s0 + $0xb0] sm:$0xff]
  %v38 = vld [vmem:[%s0 + $0xb8] sm:$0xff]
  %v39 = vld [vmem:[%s0 + $0xc0] sm:$0xff]
  %v40 = vld [vmem:[%s0 + $0xc8] sm:$0xff]
  %v41 = vld [vmem:[%s0 + $0xd0] sm:$0xff]
  %v42 = vld [vmem:[%s0 + $0xd8] sm:$0xff]
  %v43 = vld [vmem:[%s0 + $0xe0] sm:$0xff]
  %v44 = vld [vmem:[%s0 + $0xe8] sm:$0xff]
  %v45 = vld [vmem:[%s0 + $0xf0] sm:$0xff]
  %v46 = vld [vmem:[%s0 + $0xf8] sm:$0xff]
  %v47 = vld [vmem:[%s0 + $0x100] sm:$0xff]
  %v48 = vld [vmem:[%s0 + $0x108] sm:$0xff]
  %v49 = vld [vmem:[%s0 + $0x110] sm:$0xff]
  %v50 = vld [vmem:[%s0 + $0x118] sm:$0xff]
  %v51 = vld [vmem:[%s0 + $0x120] sm:$0xff]
  %v52 = vld [vmem:[%s0 + $0x128] sm:$0xff]
  %v53 = vld [vmem:[%s0 + $0x130] sm:$0xff]
  %v54 = vld [vmem:[%s0 + $0x138] sm:$0xff]
  %v55 = vld [vmem:[%s0 + $0x140] sm:$0xff]
  %v56 = vld [vmem:[%s0 + $0x148] sm:$0xff]
  %v57 = vld [vmem:[%s0 + $0x150] sm:$0xff]
  %v58 = vld [vmem:[%s0 + $0x158] sm:$0xff]
  %v59 = vld [vmem:[%s0 + $0x160] sm:$0xff]
  %v60 = vld [vmem:[%s0 + $0x168] sm:$0xff]
  %v61 = vld [vmem:[%s0 + $0x170] sm:$0xff]
  %v62 = vld [vmem:[%s0 + $0x178] sm:$0xff]
  %v63 = vld [vmem:[%s0 + $0x180] sm:$0xff]
  %v64 = vld [vmem:[%s0 + $0x188] sm:$0xff]
  %v65 = vld [vmem:[%s0 + $0x190] sm:$0xff]
  %v66 = vld [vmem:[%s0 + $0x198] sm:$0xff]
  %v67 = vld [vmem:[%s0 + $0x1a0] sm:$0xff]
  %v68 = vld [vmem:[%s0 + $0x1a8] sm:$0xff]
  %v69 = vld [vmem:[%s0 + $0x1b0] sm:$0xff]
  %v70 = vld [vmem:[%s0 + $0x1b8] sm:$0xff]
  %v71 = vld [vmem:[%s0 + $0x1c0] sm:$0xff]
  %v72 = vld [vmem:[%s0 + $0x1c8] sm:$0xff]
  %v73 = vld [vmem:[%s0 + $0x1d0] sm:$0xff]
  %v74 = vld [vmem:[%s0 + $0x1d8] sm:$0xff]
  %v75 = vld [vmem:[%s0 + $0x1e0] sm:$0xff]
  %v76 = vld [vmem:[%s0 + $0x1e8] sm:$0xff]
  %v77 = vld [vmem:[%s0 + $0x1f0] sm:$0xff]
  %v78 = vld [vmem:[%s0 + $0x1f8] sm:$0xff]
  %v79 = vld [vmem:[%s1] sm:$0xf]
  %v80 = vld [vmem:[%s1 + $0x4] sm:$0xf]
  %v81 = vld [vmem:[%s1 + $0x8] sm:$0xf]
  %v82 = vld [vmem:[%s1 + $0xc] sm:$0xf]
  %v83 = vld [vmem:[%s1 + $0x10] sm:$0xf]
  %v84 = vld [vmem:[%s1 + $0x14] sm:$0xf]
  %v85 = vld [vmem:[%s1 + $0x18] sm:$0xf]
  %v86 = vld [vmem:[%s1 + $0x1c] sm:$0xf]
  %v87 = vld [vmem:[%s1 + $0x20] sm:$0xf]
  %v88 = vld [vmem:[%s1 + $0x24] sm:$0xf]
  %v89 = vld [vmem:[%s1 + $0x28] sm:$0xf]
  %v90 = vld [vmem:[%s1 + $0x2c] sm:$0xf]
  %v91 = vld [vmem:[%s1 + $0x30] sm:$0xf]
  %v92 = vld [vmem:[%s1 + $0x34] sm:$0xf]
  %v93 = vld [vmem:[%s1 + $0x38] sm:$0xf]
  %v94 = vld [vmem:[%s1 + $0x3c] sm:$0xf]
  %v95 = vld [vmem:[%s1 + $0x40] sm:$0xf]
  %v96 = vld [vmem:[%s1 + $0x44] sm:$0xf]
  %v97 = vld [vmem:[%s1 + $0x48] sm:$0xf]
  %v98 = vld [vmem:[%s1 + $0x4c] sm:$0xf]
  %v99 = vld [vmem:[%s1 + $0x50] sm:$0xf]
  %v100 = vld [vmem:[%s1 + $0x54] sm:$0xf]
  %v101 = vld [vmem:[%s2] sm:$0x1]
  %v103 = vperm.slane %v101, 0
  %v169 = vunpack.c.l.b16 %v15
  %v170 = vunpack.c.h.b16 %v15
  %v171 = vunpack.c.l.b16 %v16
  %v172 = vunpack.c.h.b16 %v16
  %v173 = vunpack.c.l.b16 %v17
  %v174 = vunpack.c.h.b16 %v17
  %v175 = vunpack.c.l.b16 %v18
  %v176 = vunpack.c.h.b16 %v18
  %v177 = vunpack.c.l.b16 %v19
  %v178 = vunpack.c.h.b16 %v19
  %v179 = vunpack.c.l.b16 %v20
  %v180 = vunpack.c.h.b16 %v20
  %v181 = vunpack.c.l.b16 %v21
  %v182 = vunpack.c.h.b16 %v21
  %v183 = vunpack.c.l.b16 %v22
  %v184 = vunpack.c.h.b16 %v22
  %v185 = vunpack.c.l.b16 %v23
  %v186 = vunpack.c.h.b16 %v23
  %v187 = vunpack.c.l.b16 %v24
  %v188 = vunpack.c.h.b16 %v24
  %v189 = vunpack.c.l.b16 %v25
  %v190 = vunpack.c.h.b16 %v25
  %v191 = vunpack.c.l.b16 %v26
  %v192 = vunpack.c.h.b16 %v26
  %v193 = vunpack.c.l.b16 %v27
  %v194 = vunpack.c.h.b16 %v27
  %v195 = vunpack.c.l.b16 %v28
  %v196 = vunpack.c.h.b16 %v28
  %v197 = vunpack.c.l.b16 %v29
  %v198 = vunpack.c.h.b16 %v29
  %v199 = vunpack.c.l.b16 %v30
  %v200 = vunpack.c.h.b16 %v30
  %v201 = vunpack.c.l.b16 %v31
  %v202 = vunpack.c.h.b16 %v31
  %v203 = vunpack.c.l.b16 %v32
  %v204 = vunpack.c.h.b16 %v32
  %v205 = vunpack.c.l.b16 %v33
  %v206 = vunpack.c.h.b16 %v33
  %v207 = vunpack.c.l.b16 %v34
  %v208 = vunpack.c.h.b16 %v34
  %v209 = vunpack.c.l.b16 %v35
  %v210 = vunpack.c.h.b16 %v35
  %v211 = vunpack.c.l.b16 %v36
  %v212 = vunpack.c.h.b16 %v36
  %v213 = vunpack.c.l.b16 %v37
  %v214 = vunpack.c.h.b16 %v37
  %v215 = vunpack.c.l.b16 %v38
  %v216 = vunpack.c.h.b16 %v38
  %v217 = vunpack.c.l.b16 %v39
  %v218 = vunpack.c.h.b16 %v39
  %v219 = vunpack.c.l.b16 %v40
  %v220 = vunpack.c.h.b16 %v40
  %v221 = vunpack.c.l.b16 %v41
  %v222 = vunpack.c.h.b16 %v41
  %v223 = vunpack.c.l.b16 %v42
  %v224 = vunpack.c.h.b16 %v42
  %v225 = vunpack.c.l.b16 %v43
  %v226 = vunpack.c.h.b16 %v43
  %v227 = vunpack.c.l.b16 %v44
  %v228 = vunpack.c.h.b16 %v44
  %v229 = vunpack.c.l.b16 %v45
  %v230 = vunpack.c.h.b16 %v45
  %v231 = vunpack.c.l.b16 %v46
  %v232 = vunpack.c.h.b16 %v46
  %v233 = vunpack.c.l.b16 %v47
  %v234 = vunpack.c.h.b16 %v47
  %v235 = vunpack.c.l.b16 %v48
  %v236 = vunpack.c.h.b16 %v48
  %v237 = vunpack.c.l.b16 %v49
  %v238 = vunpack.c.h.b16 %v49
  %v239 = vunpack.c.l.b16 %v50
  %v240 = vunpack.c.h.b16 %v50
  %v241 = vunpack.c.l.b16 %v51
  %v242 = vunpack.c.h.b16 %v51
  %v243 = vunpack.c.l.b16 %v52
  %v244 = vunpack.c.h.b16 %v52
  %v245 = vunpack.c.l.b16 %v53
  %v246 = vunpack.c.h.b16 %v53
  %v247 = vunpack.c.l.b16 %v54
  %v248 = vunpack.c.h.b16 %v54
  %v249 = vunpack.c.l.b16 %v55
  %v250 = vunpack.c.h.b16 %v55
  %v251 = vunpack.c.l.b16 %v56
  %v252 = vunpack.c.h.b16 %v56
  %v253 = vunpack.c.l.b16 %v57
  %v254 = vunpack.c.h.b16 %v57
  %v255 = vunpack.c.l.b16 %v58
  %v256 = vunpack.c.h.b16 %v58
  %v257 = vunpack.c.l.b16 %v59
  %v258 = vunpack.c.h.b16 %v59
  %v259 = vunpack.c.l.b16 %v60
  %v260 = vunpack.c.h.b16 %v60
  %v261 = vunpack.c.l.b16 %v61
  %v262 = vunpack.c.h.b16 %v61
  %v263 = vunpack.c.l.b16 %v62
  %v264 = vunpack.c.h.b16 %v62
  %v265 = vunpack.c.l.b16 %v63
  %v266 = vunpack.c.h.b16 %v63
  %v267 = vunpack.c.l.b16 %v64
  %v268 = vunpack.c.h.b16 %v64
  %v269 = vunpack.c.l.b16 %v65
  %v270 = vunpack.c.h.b16 %v65
  %v271 = vunpack.c.l.b16 %v66
  %v272 = vunpack.c.h.b16 %v66
  %v273 = vunpack.c.l.b16 %v67
  %v274 = vunpack.c.h.b16 %v67
  %v275 = vunpack.c.l.b16 %v68
  %v276 = vunpack.c.h.b16 %v68
  %v277 = vunpack.c.l.b16 %v69
  %v278 = vunpack.c.h.b16 %v69
  %v279 = vunpack.c.l.b16 %v70
  %v280 = vunpack.c.h.b16 %v70
  %v281 = vunpack.c.l.b16 %v71
  %v282 = vunpack.c.h.b16 %v71
  %v283 = vunpack.c.l.b16 %v72
  %v284 = vunpack.c.h.b16 %v72
  %v285 = vunpack.c.l.b16 %v73
  %v286 = vunpack.c.h.b16 %v73
  %v287 = vunpack.c.l.b16 %v74
  %v288 = vunpack.c.h.b16 %v74
  %v289 = vunpack.c.l.b16 %v75
  %v290 = vunpack.c.h.b16 %v75
  %v291 = vunpack.c.l.b16 %v76
  %v292 = vunpack.c.h.b16 %v76
  %v293 = vunpack.c.l.b16 %v77
  %v294 = vunpack.c.h.b16 %v77
  %v295 = vunpack.c.l.b16 %v78
  %v296 = vunpack.c.h.b16 %v78
  %v297 = vpack.c.b16 %v171, %v169
  %v298 = vpack.c.b16 %v172, %v170
  %v299 = vpack.c.b16 %v175, %v173
  %v300 = vpack.c.b16 %v176, %v174
  %v301 = vpack.c.b16 %v179, %v177
  %v302 = vpack.c.b16 %v180, %v178
  %v303 = vpack.c.b16 %v183, %v181
  %v304 = vpack.c.b16 %v184, %v182
  %v305 = vpack.c.b16 %v187, %v185
  %v306 = vpack.c.b16 %v188, %v186
  %v307 = vpack.c.b16 %v191, %v189
  %v308 = vpack.c.b16 %v192, %v190
  %v309 = vpack.c.b16 %v195, %v193
  %v310 = vpack.c.b16 %v196, %v194
  %v311 = vpack.c.b16 %v199, %v197
  %v312 = vpack.c.b16 %v200, %v198
  %v313 = vpack.c.b16 %v203, %v201
  %v314 = vpack.c.b16 %v204, %v202
  %v315 = vpack.c.b16 %v207, %v205
  %v316 = vpack.c.b16 %v208, %v206
  %v317 = vpack.c.b16 %v211, %v209
  %v318 = vpack.c.b16 %v212, %v210
  %v319 = vpack.c.b16 %v215, %v213
  %v320 = vpack.c.b16 %v216, %v214
  %v321 = vpack.c.b16 %v219, %v217
  %v322 = vpack.c.b16 %v220, %v218
  %v323 = vpack.c.b16 %v223, %v221
  %v324 = vpack.c.b16 %v224, %v222
  %v325 = vpack.c.b16 %v227, %v225
  %v326 = vpack.c.b16 %v228, %v226
  %v327 = vpack.c.b16 %v231, %v229
  %v328 = vpack.c.b16 %v232, %v230
  %v329 = vpack.c.b16 %v235, %v233
  %v330 = vpack.c.b16 %v236, %v234
  %v331 = vpack.c.b16 %v239, %v237
  %v332 = vpack.c.b16 %v240, %v238
  %v333 = vpack.c.b16 %v243, %v241
  %v334 = vpack.c.b16 %v244, %v242
  %v335 = vpack.c.b16 %v247, %v245
  %v336 = vpack.c.b16 %v248, %v246
  %v337 = vpack.c.b16 %v251, %v249
  %v338 = vpack.c.b16 %v252, %v250
  %v339 = vpack.c.b16 %v255, %v253
  %v340 = vpack.c.b16 %v256, %v254
  %v341 = vpack.c.b16 %v259, %v257
  %v342 = vpack.c.b16 %v260, %v258
  %v343 = vpack.c.b16 %v263, %v261
  %v344 = vpack.c.b16 %v264, %v262
  %v345 = vpack.c.b16 %v267, %v265
  %v346 = vpack.c.b16 %v268, %v266
  %v347 = vpack.c.b16 %v271, %v269
  %v348 = vpack.c.b16 %v272, %v270
  %v349 = vpack.c.b16 %v275, %v273
  %v350 = vpack.c.b16 %v276, %v274
  %v351 = vpack.c.b16 %v279, %v277
  %v352 = vpack.c.b16 %v280, %v278
  %v353 = vpack.c.b16 %v283, %v281
  %v354 = vpack.c.b16 %v284, %v282
  %v355 = vpack.c.b16 %v287, %v285
  %v356 = vpack.c.b16 %v288, %v286
  %v357 = vpack.c.b16 %v291, %v289
  %v358 = vpack.c.b16 %v292, %v290
  %v359 = vpack.c.b16 %v295, %v293
  %v360 = vpack.c.b16 %v296, %v294
  %v415 = vunpack.c.l.b16 %v79
  %v416 = vunpack.c.l.b16 %v80
  %v417 = vunpack.c.l.b16 %v81
  %v418 = vunpack.c.l.b16 %v82
  %v419 = vunpack.c.l.b16 %v83
  %v420 = vunpack.c.l.b16 %v84
  %v421 = vunpack.c.l.b16 %v85
  %v422 = vunpack.c.l.b16 %v86
  %v423 = vunpack.c.l.b16 %v87
  %v424 = vunpack.c.l.b16 %v88
  %v425 = vunpack.c.l.b16 %v89
  %v426 = vunpack.c.l.b16 %v90
  %v427 = vunpack.c.l.b16 %v91
  %v428 = vunpack.c.l.b16 %v92
  %v429 = vunpack.c.l.b16 %v93
  %v430 = vunpack.c.l.b16 %v94
  %v431 = vunpack.c.l.b16 %v95
  %v432 = vunpack.c.l.b16 %v96
  %v433 = vunpack.c.l.b16 %v97
  %v434 = vunpack.c.l.b16 %v98
  %v435 = vunpack.c.l.b16 %v99
  %v436 = vunpack.c.l.b16 %v100
  %v437 = vpack.c.b16 %v416, %v415
  %v438 = vpack.c.b16 %v418, %v417
  %v439 = vpack.c.b16 %v420, %v419
  %v440 = vpack.c.b16 %v422, %v421
  %v441 = vpack.c.b16 %v424, %v423
  %v442 = vpack.c.b16 %v426, %v425
  %v443 = vpack.c.b16 %v428, %v427
  %v444 = vpack.c.b16 %v430, %v429
  %v445 = vpack.c.b16 %v432, %v431
  %v446 = vpack.c.b16 %v434, %v433
  %v447 = vpack.c.b16 %v436, %v435
  %vm459 = vcmask 392192
  %v461 = vsel %vm459, %v298, 0
  %v464 = vsel %vm459, %v300, 0
  %v467 = vsel %vm459, %v302, 0
  %v470 = vsel %vm459, %v304, 0
  %v473 = vsel %vm459, %v306, 0
  %v476 = vsel %vm459, %v308, 0
  %v479 = vsel %vm459, %v310, 0
  %v482 = vsel %vm459, %v312, 0
  %v485 = vsel %vm459, %v314, 0
  %v488 = vsel %vm459, %v316, 0
  %v491 = vsel %vm459, %v318, 0
  %v494 = vsel %vm459, %v320, 0
  %v497 = vsel %vm459, %v322, 0
  %v500 = vsel %vm459, %v324, 0
  %v503 = vsel %vm459, %v326, 0
  %v506 = vsel %vm459, %v328, 0
  %v509 = vsel %vm459, %v330, 0
  %v512 = vsel %vm459, %v332, 0
  %v515 = vsel %vm459, %v334, 0
  %v518 = vsel %vm459, %v336, 0
  %v521 = vsel %vm459, %v338, 0
  %v524 = vsel %vm459, %v340, 0
  %v527 = vsel %vm459, %v342, 0
  %v530 = vsel %vm459, %v344, 0
  %v533 = vsel %vm459, %v346, 0
  %v536 = vsel %vm459, %v348, 0
  %v539 = vsel %vm459, %v350, 0
  %v542 = vsel %vm459, %v352, 0
  %v545 = vsel %vm459, %v354, 0
  %v548 = vsel %vm459, %v356, 0
  %v551 = vsel %vm459, %v358, 0
  %v554 = vsel %vm459, %v360, 0
  %556 = vmatpush.bf16.msra.mxu0 %v444
  %557 = vmatpush.bf16.msra.mxu0 %v443
  %558 = vmatpush.bf16.msra.mxu0 %v442
  %559 = vmatpush.bf16.msra.mxu0 %v441
  %560 = vmatpush.bf16.msra.mxu0 %v440
  %561 = vmatpush.bf16.msra.mxu0 %v439
  %562 = vmatpush.bf16.msra.mxu0 %v438
  %563 = vmatpush.bf16.msra.mxu0 %v437
  %564 = vmatmul.bf16.gmra.mxu0 %v297
  %v565 = vpop.f32.mrf.mxu0
  %v566 = vadd.f32 %v103, %v565
  %v567 = vpop.f32.mrf.mxu0
  %v568 = vadd.f32 %v103, %v567
  %569 = vmatmul.bf16.gmra.mxu0 %v299
  %v570 = vpop.f32.mrf.mxu0
  %v571 = vadd.f32 %v103, %v570
  %v572 = vpop.f32.mrf.mxu0
  %v573 = vadd.f32 %v103, %v572
  %574 = vmatmul.bf16.gmra.mxu0 %v301
  %v575 = vpop.f32.mrf.mxu0
  %v576 = vadd.f32 %v103, %v575
  %v577 = vpop.f32.mrf.mxu0
  %v578 = vadd.f32 %v103, %v577
  %579 = vmatmul.bf16.gmra.mxu0 %v303
  %v580 = vpop.f32.mrf.mxu0
  %v581 = vadd.f32 %v103, %v580
  %v582 = vpop.f32.mrf.mxu0
  %v583 = vadd.f32 %v103, %v582
  %584 = vmatmul.bf16.gmra.mxu0 %v305
  %v585 = vpop.f32.mrf.mxu0
  %v586 = vadd.f32 %v103, %v585
  %v587 = vpop.f32.mrf.mxu0
  %v588 = vadd.f32 %v103, %v587
  %589 = vmatmul.bf16.gmra.mxu0 %v307
  %v590 = vpop.f32.mrf.mxu0
  %v591 = vadd.f32 %v103, %v590
  %v592 = vpop.f32.mrf.mxu0
  %v593 = vadd.f32 %v103, %v592
  %594 = vmatmul.bf16.gmra.mxu0 %v309
  %v595 = vpop.f32.mrf.mxu0
  %v596 = vadd.f32 %v103, %v595
  %v597 = vpop.f32.mrf.mxu0
  %v598 = vadd.f32 %v103, %v597
  %599 = vmatmul.bf16.gmra.mxu0 %v311
  %v600 = vpop.f32.mrf.mxu0
  %v601 = vadd.f32 %v103, %v600
  %v602 = vpop.f32.mrf.mxu0
  %v603 = vadd.f32 %v103, %v602
  %604 = vmatmul.bf16.gmra.mxu0 %v313
  %v605 = vpop.f32.mrf.mxu0
  %v606 = vadd.f32 %v103, %v605
  %v607 = vpop.f32.mrf.mxu0
  %v608 = vadd.f32 %v103, %v607
  %609 = vmatmul.bf16.gmra.mxu0 %v315
  %v610 = vpop.f32.mrf.mxu0
  %v611 = vadd.f32 %v103, %v610
  %v612 = vpop.f32.mrf.mxu0
  %v613 = vadd.f32 %v103, %v612
  %614 = vmatmul.bf16.gmra.mxu0 %v317
  %v615 = vpop.f32.mrf.mxu0
  %v616 = vadd.f32 %v103, %v615
  %v617 = vpop.f32.mrf.mxu0
  %v618 = vadd.f32 %v103, %v617
  %619 = vmatmul.bf16.gmra.mxu0 %v319
  %v620 = vpop.f32.mrf.mxu0
  %v621 = vadd.f32 %v103, %v620
  %v622 = vpop.f32.mrf.mxu0
  %v623 = vadd.f32 %v103, %v622
  %624 = vmatmul.bf16.gmra.mxu0 %v321
  %v625 = vpop.f32.mrf.mxu0
  %v626 = vadd.f32 %v103, %v625
  %v627 = vpop.f32.mrf.mxu0
  %v628 = vadd.f32 %v103, %v627
  %629 = vmatmul.bf16.gmra.mxu0 %v323
  %v630 = vpop.f32.mrf.mxu0
  %v631 = vadd.f32 %v103, %v630
  %v632 = vpop.f32.mrf.mxu0
  %v633 = vadd.f32 %v103, %v632
  %634 = vmatmul.bf16.gmra.mxu0 %v325
  %v635 = vpop.f32.mrf.mxu0
  %v636 = vadd.f32 %v103, %v635
  %v637 = vpop.f32.mrf.mxu0
  %v638 = vadd.f32 %v103, %v637
  %639 = vmatmul.bf16.gmra.mxu0 %v327
  %v640 = vpop.f32.mrf.mxu0
  %v641 = vadd.f32 %v103, %v640
  %v642 = vpop.f32.mrf.mxu0
  %v643 = vadd.f32 %v103, %v642
  %644 = vmatmul.bf16.gmra.mxu0 %v329
  %v645 = vpop.f32.mrf.mxu0
  %v646 = vadd.f32 %v103, %v645
  %v647 = vpop.f32.mrf.mxu0
  %v648 = vadd.f32 %v103, %v647
  %649 = vmatmul.bf16.gmra.mxu0 %v331
  %v650 = vpop.f32.mrf.mxu0
  %v651 = vadd.f32 %v103, %v650
  %v652 = vpop.f32.mrf.mxu0
  %v653 = vadd.f32 %v103, %v652
  %654 = vmatmul.bf16.gmra.mxu0 %v333
  %v655 = vpop.f32.mrf.mxu0
  %v656 = vadd.f32 %v103, %v655
  %v657 = vpop.f32.mrf.mxu0
  %v658 = vadd.f32 %v103, %v657
  %659 = vmatmul.bf16.gmra.mxu0 %v335
  %v660 = vpop.f32.mrf.mxu0
  %v661 = vadd.f32 %v103, %v660
  %v662 = vpop.f32.mrf.mxu0
  %v663 = vadd.f32 %v103, %v662
  %664 = vmatmul.bf16.gmra.mxu0 %v337
  %v665 = vpop.f32.mrf.mxu0
  %v666 = vadd.f32 %v103, %v665
  %v667 = vpop.f32.mrf.mxu0
  %v668 = vadd.f32 %v103, %v667
  %669 = vmatmul.bf16.gmra.mxu0 %v339
  %v670 = vpop.f32.mrf.mxu0
  %v671 = vadd.f32 %v103, %v670
  %v672 = vpop.f32.mrf.mxu0
  %v673 = vadd.f32 %v103, %v672
  %674 = vmatmul.bf16.gmra.mxu0 %v341
  %v675 = vpop.f32.mrf.mxu0
  %v676 = vadd.f32 %v103, %v675
  %v677 = vpop.f32.mrf.mxu0
  %v678 = vadd.f32 %v103, %v677
  %679 = vmatmul.bf16.gmra.mxu0 %v343
  %v680 = vpop.f32.mrf.mxu0
  %v681 = vadd.f32 %v103, %v680
  %v682 = vpop.f32.mrf.mxu0
  %v683 = vadd.f32 %v103, %v682
  %684 = vmatmul.bf16.gmra.mxu0 %v345
  %v685 = vpop.f32.mrf.mxu0
  %v686 = vadd.f32 %v103, %v685
  %v687 = vpop.f32.mrf.mxu0
  %v688 = vadd.f32 %v103, %v687
  %689 = vmatmul.bf16.gmra.mxu0 %v347
  %v690 = vpop.f32.mrf.mxu0
  %v691 = vadd.f32 %v103, %v690
  %v692 = vpop.f32.mrf.mxu0
  %v693 = vadd.f32 %v103, %v692
  %694 = vmatmul.bf16.gmra.mxu0 %v349
  %v695 = vpop.f32.mrf.mxu0
  %v696 = vadd.f32 %v103, %v695
  %v697 = vpop.f32.mrf.mxu0
  %v698 = vadd.f32 %v103, %v697
  %699 = vmatmul.bf16.gmra.mxu0 %v351
  %v700 = vpop.f32.mrf.mxu0
  %v701 = vadd.f32 %v103, %v700
  %v702 = vpop.f32.mrf.mxu0
  %v703 = vadd.f32 %v103, %v702
  %704 = vmatmul.bf16.gmra.mxu0 %v353
  %v705 = vpop.f32.mrf.mxu0
  %v706 = vadd.f32 %v103, %v705
  %v707 = vpop.f32.mrf.mxu0
  %v708 = vadd.f32 %v103, %v707
  %709 = vmatmul.bf16.gmra.mxu0 %v355
  %v710 = vpop.f32.mrf.mxu0
  %v711 = vadd.f32 %v103, %v710
  %v712 = vpop.f32.mrf.mxu0
  %v713 = vadd.f32 %v103, %v712
  %714 = vmatmul.bf16.gmra.mxu0 %v357
  %v715 = vpop.f32.mrf.mxu0
  %v716 = vadd.f32 %v103, %v715
  %v717 = vpop.f32.mrf.mxu0
  %v718 = vadd.f32 %v103, %v717
  %719 = vmatmul.bf16.gmra.mxu0 %v359
  %v720 = vpop.f32.mrf.mxu0
  %v721 = vadd.f32 %v103, %v720
  %v722 = vpop.f32.mrf.mxu0
  %v723 = vadd.f32 %v103, %v722
  %724 = vdwg.mxu0
  %725 = vmatpush.bf16.msra.mxu0 0
  %726 = vmatpush.bf16.msra.mxu0 0
  %727 = vmatpush.bf16.msra.mxu0 0
  %728 = vmatpush.bf16.msra.mxu0 0
  %729 = vmatpush.bf16.msra.mxu0 0
  %730 = vmatpush.bf16.msra.mxu0 %v447
  %731 = vmatpush.bf16.msra.mxu0 %v446
  %732 = vmatpush.bf16.msra.mxu0 %v445
  %733 = vmatmul.bf16.gmra.mxu0 %v461
  %v734 = vpop.f32.mrf.mxu0
  %v735 = vadd.f32 %v566, %v734
  %v736 = vpop.f32.mrf.mxu0
  %v737 = vadd.f32 %v568, %v736
  %738 = vmatmul.bf16.gmra.mxu0 %v464
  %v739 = vpop.f32.mrf.mxu0
  %v740 = vadd.f32 %v571, %v739
  %v741 = vpop.f32.mrf.mxu0
  %v742 = vadd.f32 %v573, %v741
  %743 = vmatmul.bf16.gmra.mxu0 %v467
  %v744 = vpop.f32.mrf.mxu0
  %v745 = vadd.f32 %v576, %v744
  %v746 = vpop.f32.mrf.mxu0
  %v747 = vadd.f32 %v578, %v746
  %748 = vmatmul.bf16.gmra.mxu0 %v470
  %v749 = vpop.f32.mrf.mxu0
  %v750 = vadd.f32 %v581, %v749
  %v751 = vpop.f32.mrf.mxu0
  %v752 = vadd.f32 %v583, %v751
  %753 = vmatmul.bf16.gmra.mxu0 %v473
  %v754 = vpop.f32.mrf.mxu0
  %v755 = vadd.f32 %v586, %v754
  %v756 = vpop.f32.mrf.mxu0
  %v757 = vadd.f32 %v588, %v756
  %758 = vmatmul.bf16.gmra.mxu0 %v476
  %v759 = vpop.f32.mrf.mxu0
  %v760 = vadd.f32 %v591, %v759
  %v761 = vpop.f32.mrf.mxu0
  %v762 = vadd.f32 %v593, %v761
  %763 = vmatmul.bf16.gmra.mxu0 %v479
  %v764 = vpop.f32.mrf.mxu0
  %v765 = vadd.f32 %v596, %v764
  %v766 = vpop.f32.mrf.mxu0
  %v767 = vadd.f32 %v598, %v766
  %768 = vmatmul.bf16.gmra.mxu0 %v482
  %v769 = vpop.f32.mrf.mxu0
  %v770 = vadd.f32 %v601, %v769
  %v771 = vpop.f32.mrf.mxu0
  %v772 = vadd.f32 %v603, %v771
  %773 = vmatmul.bf16.gmra.mxu0 %v485
  %v774 = vpop.f32.mrf.mxu0
  %v775 = vadd.f32 %v606, %v774
  %v776 = vpop.f32.mrf.mxu0
  %v777 = vadd.f32 %v608, %v776
  %778 = vmatmul.bf16.gmra.mxu0 %v488
  %v779 = vpop.f32.mrf.mxu0
  %v780 = vadd.f32 %v611, %v779
  %v781 = vpop.f32.mrf.mxu0
  %v782 = vadd.f32 %v613, %v781
  %783 = vmatmul.bf16.gmra.mxu0 %v491
  %v784 = vpop.f32.mrf.mxu0
  %v785 = vadd.f32 %v616, %v784
  %v786 = vpop.f32.mrf.mxu0
  %v787 = vadd.f32 %v618, %v786
  %788 = vmatmul.bf16.gmra.mxu0 %v494
  %v789 = vpop.f32.mrf.mxu0
  %v790 = vadd.f32 %v621, %v789
  %v791 = vpop.f32.mrf.mxu0
  %v792 = vadd.f32 %v623, %v791
  %793 = vmatmul.bf16.gmra.mxu0 %v497
  %v794 = vpop.f32.mrf.mxu0
  %v795 = vadd.f32 %v626, %v794
  %v796 = vpop.f32.mrf.mxu0
  %v797 = vadd.f32 %v628, %v796
  %798 = vmatmul.bf16.gmra.mxu0 %v500
  %v799 = vpop.f32.mrf.mxu0
  %v800 = vadd.f32 %v631, %v799
  %v801 = vpop.f32.mrf.mxu0
  %v802 = vadd.f32 %v633, %v801
  %803 = vmatmul.bf16.gmra.mxu0 %v503
  %v804 = vpop.f32.mrf.mxu0
  %v805 = vadd.f32 %v636, %v804
  %v806 = vpop.f32.mrf.mxu0
  %v807 = vadd.f32 %v638, %v806
  %808 = vmatmul.bf16.gmra.mxu0 %v506
  %v809 = vpop.f32.mrf.mxu0
  %v810 = vadd.f32 %v641, %v809
  %v811 = vpop.f32.mrf.mxu0
  %v812 = vadd.f32 %v643, %v811
  %813 = vmatmul.bf16.gmra.mxu0 %v509
  %v814 = vpop.f32.mrf.mxu0
  %v815 = vadd.f32 %v646, %v814
  %v816 = vpop.f32.mrf.mxu0
  %v817 = vadd.f32 %v648, %v816
  %818 = vmatmul.bf16.gmra.mxu0 %v512
  %v819 = vpop.f32.mrf.mxu0
  %v820 = vadd.f32 %v651, %v819
  %v821 = vpop.f32.mrf.mxu0
  %v822 = vadd.f32 %v653, %v821
  %823 = vmatmul.bf16.gmra.mxu0 %v515
  %v824 = vpop.f32.mrf.mxu0
  %v825 = vadd.f32 %v656, %v824
  %v826 = vpop.f32.mrf.mxu0
  %v827 = vadd.f32 %v658, %v826
  %828 = vmatmul.bf16.gmra.mxu0 %v518
  %v829 = vpop.f32.mrf.mxu0
  %v830 = vadd.f32 %v661, %v829
  %v831 = vpop.f32.mrf.mxu0
  %v832 = vadd.f32 %v663, %v831
  %833 = vmatmul.bf16.gmra.mxu0 %v521
  %v834 = vpop.f32.mrf.mxu0
  %v835 = vadd.f32 %v666, %v834
  %v836 = vpop.f32.mrf.mxu0
  %v837 = vadd.f32 %v668, %v836
  %838 = vmatmul.bf16.gmra.mxu0 %v524
  %v839 = vpop.f32.mrf.mxu0
  %v840 = vadd.f32 %v671, %v839
  %v841 = vpop.f32.mrf.mxu0
  %v842 = vadd.f32 %v673, %v841
  %843 = vmatmul.bf16.gmra.mxu0 %v527
  %v844 = vpop.f32.mrf.mxu0
  %v845 = vadd.f32 %v676, %v844
  %v846 = vpop.f32.mrf.mxu0
  %v847 = vadd.f32 %v678, %v846
  %848 = vmatmul.bf16.gmra.mxu0 %v530
  %v849 = vpop.f32.mrf.mxu0
  %v850 = vadd.f32 %v681, %v849
  %v851 = vpop.f32.mrf.mxu0
  %v852 = vadd.f32 %v683, %v851
  %853 = vmatmul.bf16.gmra.mxu0 %v533
  %v854 = vpop.f32.mrf.mxu0
  %v855 = vadd.f32 %v686, %v854
  %v856 = vpop.f32.mrf.mxu0
  %v857 = vadd.f32 %v688, %v856
  %858 = vmatmul.bf16.gmra.mxu0 %v536
  %v859 = vpop.f32.mrf.mxu0
  %v860 = vadd.f32 %v691, %v859
  %v861 = vpop.f32.mrf.mxu0
  %v862 = vadd.f32 %v693, %v861
  %863 = vmatmul.bf16.gmra.mxu0 %v539
  %v864 = vpop.f32.mrf.mxu0
  %v865 = vadd.f32 %v696, %v864
  %v866 = vpop.f32.mrf.mxu0
  %v867 = vadd.f32 %v698, %v866
  %868 = vmatmul.bf16.gmra.mxu0 %v542
  %v869 = vpop.f32.mrf.mxu0
  %v870 = vadd.f32 %v701, %v869
  %v871 = vpop.f32.mrf.mxu0
  %v872 = vadd.f32 %v703, %v871
  %873 = vmatmul.bf16.gmra.mxu0 %v545
  %v874 = vpop.f32.mrf.mxu0
  %v875 = vadd.f32 %v706, %v874
  %v876 = vpop.f32.mrf.mxu0
  %v877 = vadd.f32 %v708, %v876
  %878 = vmatmul.bf16.gmra.mxu0 %v548
  %v879 = vpop.f32.mrf.mxu0
  %v880 = vadd.f32 %v711, %v879
  %v881 = vpop.f32.mrf.mxu0
  %v882 = vadd.f32 %v713, %v881
  %883 = vmatmul.bf16.gmra.mxu0 %v551
  %v884 = vpop.f32.mrf.mxu0
  %v885 = vadd.f32 %v716, %v884
  %v886 = vpop.f32.mrf.mxu0
  %v887 = vadd.f32 %v718, %v886
  %888 = vmatmul.bf16.gmra.mxu0 %v554
  %v889 = vpop.f32.mrf.mxu0
  %v890 = vadd.f32 %v721, %v889
  %v891 = vpop.f32.mrf.mxu0
  %v892 = vadd.f32 %v723, %v891
  %893 = vdwg.mxu0
  %894 = vst [vmem:[%s3] sm:$0xff] %v735
  %895 = vst [vmem:[%s3 + $0x8] sm:$0xff] %v737
  %896 = vst [vmem:[%s3 + $0x10] sm:$0xff] %v740
  %897 = vst [vmem:[%s3 + $0x18] sm:$0xff] %v742
  %898 = vst [vmem:[%s3 + $0x20] sm:$0xff] %v745
  %899 = vst [vmem:[%s3 + $0x28] sm:$0xff] %v747
  %900 = vst [vmem:[%s3 + $0x30] sm:$0xff] %v750
  %901 = vst [vmem:[%s3 + $0x38] sm:$0xff] %v752
  %902 = vst [vmem:[%s3 + $0x40] sm:$0xff] %v755
  %903 = vst [vmem:[%s3 + $0x48] sm:$0xff] %v757
  %904 = vst [vmem:[%s3 + $0x50] sm:$0xff] %v760
  %905 = vst [vmem:[%s3 + $0x58] sm:$0xff] %v762
  %906 = vst [vmem:[%s3 + $0x60] sm:$0xff] %v765
  %907 = vst [vmem:[%s3 + $0x68] sm:$0xff] %v767
  %908 = vst [vmem:[%s3 + $0x70] sm:$0xff] %v770
  %909 = vst [vmem:[%s3 + $0x78] sm:$0xff] %v772
  %910 = vst [vmem:[%s3 + $0x80] sm:$0xff] %v775
  %911 = vst [vmem:[%s3 + $0x88] sm:$0xff] %v777
  %912 = vst [vmem:[%s3 + $0x90] sm:$0xff] %v780
  %913 = vst [vmem:[%s3 + $0x98] sm:$0xff] %v782
  %914 = vst [vmem:[%s3 + $0xa0] sm:$0xff] %v785
  %915 = vst [vmem:[%s3 + $0xa8] sm:$0xff] %v787
  %916 = vst [vmem:[%s3 + $0xb0] sm:$0xff] %v790
  %917 = vst [vmem:[%s3 + $0xb8] sm:$0xff] %v792
  %918 = vst [vmem:[%s3 + $0xc0] sm:$0xff] %v795
  %919 = vst [vmem:[%s3 + $0xc8] sm:$0xff] %v797
  %920 = vst [vmem:[%s3 + $0xd0] sm:$0xff] %v800
  %921 = vst [vmem:[%s3 + $0xd8] sm:$0xff] %v802
  %922 = vst [vmem:[%s3 + $0xe0] sm:$0xff] %v805
  %923 = vst [vmem:[%s3 + $0xe8] sm:$0xff] %v807
  %924 = vst [vmem:[%s3 + $0xf0] sm:$0xff] %v810
  %925 = vst [vmem:[%s3 + $0xf8] sm:$0xff] %v812
  %926 = vst [vmem:[%s3 + $0x100] sm:$0xff] %v815
  %927 = vst [vmem:[%s3 + $0x108] sm:$0xff] %v817
  %928 = vst [vmem:[%s3 + $0x110] sm:$0xff] %v820
  %929 = vst [vmem:[%s3 + $0x118] sm:$0xff] %v822
  %930 = vst [vmem:[%s3 + $0x120] sm:$0xff] %v825
  %931 = vst [vmem:[%s3 + $0x128] sm:$0xff] %v827
  %932 = vst [vmem:[%s3 + $0x130] sm:$0xff] %v830
  %933 = vst [vmem:[%s3 + $0x138] sm:$0xff] %v832
  %934 = vst [vmem:[%s3 + $0x140] sm:$0xff] %v835
  %935 = vst [vmem:[%s3 + $0x148] sm:$0xff] %v837
  %936 = vst [vmem:[%s3 + $0x150] sm:$0xff] %v840
  %937 = vst [vmem:[%s3 + $0x158] sm:$0xff] %v842
  %938 = vst [vmem:[%s3 + $0x160] sm:$0xff] %v845
  %939 = vst [vmem:[%s3 + $0x168] sm:$0xff] %v847
  %940 = vst [vmem:[%s3 + $0x170] sm:$0xff] %v850
  %941 = vst [vmem:[%s3 + $0x178] sm:$0xff] %v852
  %942 = vst [vmem:[%s3 + $0x180] sm:$0xff] %v855
  %943 = vst [vmem:[%s3 + $0x188] sm:$0xff] %v857
  %944 = vst [vmem:[%s3 + $0x190] sm:$0xff] %v860
  %945 = vst [vmem:[%s3 + $0x198] sm:$0xff] %v862
  %946 = vst [vmem:[%s3 + $0x1a0] sm:$0xff] %v865
  %947 = vst [vmem:[%s3 + $0x1a8] sm:$0xff] %v867
  %948 = vst [vmem:[%s3 + $0x1b0] sm:$0xff] %v870
  %949 = vst [vmem:[%s3 + $0x1b8] sm:$0xff] %v872
  %950 = vst [vmem:[%s3 + $0x1c0] sm:$0xff] %v875
  %951 = vst [vmem:[%s3 + $0x1c8] sm:$0xff] %v877
  %952 = vst [vmem:[%s3 + $0x1d0] sm:$0xff] %v880
  %953 = vst [vmem:[%s3 + $0x1d8] sm:$0xff] %v882
  %954 = vst [vmem:[%s3 + $0x1e0] sm:$0xff] %v885
  %955 = vst [vmem:[%s3 + $0x1e8] sm:$0xff] %v887
  %956 = vst [vmem:[%s3 + $0x1f0] sm:$0xff] %v890
  %957 = vst [vmem:[%s3 + $0x1f8] sm:$0xff] %v892
  // Predicated region
  $region14: #{_forward.1} parent=0 // pred_check
    _
  $region15: #{_forward.1} parent=0 // pred_check_branch
    %959 = sbr.rel (0) target = $region17
  $region16: #{_forward.1} parent=0 // pred_region
    _
  $region17: #{_forward.1} parent=0 // pred_fallthru
    _
  // Predicated region
  $region18: #{_forward.1} parent=0 // pred_check
    _
  $region19: #{_forward.1} parent=0 // pred_check_branch
    %961 = sbr.rel (0) target = $region21
  $region20: #{_forward.1} parent=0 // pred_region
    _
  $region21: #{_forward.1} parent=0 // pred_fallthru
    _

</llo_original>
